<compile_context>
chip_gen: v7x
topology: tpu7x:2x2x1
jax: 0.10.0
libtpu: 0.0.40
codegen_flags: <defaults>
</compile_context>

<pallas_src>
import jax
import jax.numpy as jnp
from jax.experimental import pallas as pl
from jax.experimental.pallas import tpu as pltpu

IN_DIM = 28 * 28   # 784
H1 = 256
H2 = 64
OUT = 10
OUT_PAD = 128      # lane-dense padded output width


def mlp_kernel(x_ref, w1_ref, b1_ref, w2_ref, b2_ref, w3_ref, b3_ref, o_ref):
    # x_ref : (TB, IN_DIM)          (f32 or bf16, streamed as produced upstream)
    # w1_ref: (IN_DIM, H1), b1_ref: (1, H1)         (f32)
    # w2_ref: (H1, H2),     b2_ref: (1, H2)         (f32)
    # w3_ref: (H2, OUT_PAD), b3_ref: (1, OUT_PAD)   (f32, zero-padded lanes)
    # o_ref : (TB, OUT_PAD)                          (f32)
    bf = jnp.bfloat16

    x = x_ref[...].astype(bf)

    # Matmuls in bf16 (one MXU pass) with f32 accumulation; bias/ReLU in f32.
    h1 = jnp.dot(x, w1_ref[...].astype(bf),
                 preferred_element_type=jnp.float32) + b1_ref[...]
    h1 = jnp.maximum(h1, 0.0)                                   # ReLU

    h2 = jnp.dot(h1.astype(bf), w2_ref[...].astype(bf),
                 preferred_element_type=jnp.float32) + b2_ref[...]
    h2 = jnp.maximum(h2, 0.0)                                   # ReLU

    y = jnp.dot(h2.astype(bf), w3_ref[...].astype(bf),
                preferred_element_type=jnp.float32) + b3_ref[...]
    o_ref[...] = y.astype(o_ref.dtype)


def _pick_batch_tile(batch):
    """Batch tile: big enough to hit the HBM roofline, >= 2 grid steps when
    possible (v7x dual-TC), always a legal (8,128)-tileable or full-dim block."""
    if batch >= 2048:
        return 1024          # grid >= 2
    if batch >= 1024:
        return 512           # grid >= 2
    if batch >= 512:
        return 256
    if batch >= 16 and batch % 8 == 0:
        return max(8, ((batch // 2) // 8) * 8)   # ~2 steps, multiple of 8
    return batch             # tiny/ragged batch: one full-batch block


def mnist_mlp(x_nchw, params):
    """Forward pass. x_nchw: (B, 1, 28, 28) -> logits (B, 10) float32."""
    batch = x_nchw.shape[0]
    x = x_nchw.reshape(batch, -1)            # nn.Flatten (dtype preserved)
    w1, b1, w2, b2, w3, b3 = params

    # Zero-pad the final layer to a lane-dense 128-wide output (tiny, once per call).
    w3p = jnp.zeros((H2, OUT_PAD), w3.dtype).at[:, :OUT].set(w3)
    b3p = jnp.zeros((1, OUT_PAD), b3.dtype).at[:, :OUT].set(b3)

    tb = _pick_batch_tile(batch)
    grid = (pl.cdiv(batch, tb),)             # partial last block is masked by Pallas

    const = lambda i: (0, 0)                 # weights/biases: same block every step

    out = pl.pallas_call(
        mlp_kernel,
        out_shape=jax.ShapeDtypeStruct((batch, OUT_PAD), jnp.float32),
        grid_spec=pltpu.PrefetchScalarGridSpec(
            num_scalar_prefetch=0,
            grid=grid,
            in_specs=[
                pl.BlockSpec((tb, IN_DIM), lambda i: (i, 0)),
                pl.BlockSpec((IN_DIM, H1), const),
                pl.BlockSpec((1, H1), const),
                pl.BlockSpec((H1, H2), const),
                pl.BlockSpec((1, H2), const),
                pl.BlockSpec((H2, OUT_PAD), const),
                pl.BlockSpec((1, OUT_PAD), const),
            ],
            out_specs=pl.BlockSpec((tb, OUT_PAD), lambda i: (i, 0)),
        ),
        compiler_params=pltpu.CompilerParams(
            dimension_semantics=("parallel",),
            vmem_limit_bytes=32 * 1024 * 1024),
    )(x, w1, b1, w2, b2, w3p, b3p)

    return out[:, :OUT]


def init_params(key):
    """Deterministic synthetic parameters (PyTorch nn.Linear-style uniform init)."""
    ks = jax.random.split(key, 6)

    def linear(kw, kb, fan_in, fan_out):
        bound = 1.0 / jnp.sqrt(jnp.float32(fan_in))
        w = jax.random.uniform(kw, (fan_in, fan_out), jnp.float32, -bound, bound)
        b = jax.random.uniform(kb, (1, fan_out), jnp.float32, -bound, bound)
        return w, b

    w1, b1 = linear(ks[0], ks[1], IN_DIM, H1)
    w2, b2 = linear(ks[2], ks[3], H1, H2)
    w3, b3 = linear(ks[4], ks[5], H2, OUT)
    return w1, b1, w2, b2, w3, b3


def _reference(x_nchw, params):
    """Pure-JAX reference with the same explicit bf16-matmul / f32-accumulate path."""
    w1, b1, w2, b2, w3, b3 = params
    bf = jnp.bfloat16
    x = x_nchw.reshape(x_nchw.shape[0], -1)
    h1 = jnp.maximum(jnp.dot(x.astype(bf), w1.astype(bf),
                             preferred_element_type=jnp.float32) + b1, 0.0)
    h2 = jnp.maximum(jnp.dot(h1.astype(bf), w2.astype(bf),
                             preferred_element_type=jnp.float32) + b2, 0.0)
    return jnp.dot(h2.astype(bf), w3.astype(bf),
                   preferred_element_type=jnp.float32) + b3


if __name__ == "__main__":
    key = jax.random.PRNGKey(0)
    kx, kp = jax.random.split(key)

    # Small batch, MNIST-shaped NCHW input as implied by the module.
    x = jax.random.uniform(kx, (2, 1, 28, 28), jnp.float32)
    params = init_params(kp)

    y = mnist_mlp(x, params)
    y = jax.block_until_ready(y)

    assert y.shape == (2, OUT) and y.dtype == jnp.float32
    y_ref = _reference(x, params)
    assert jnp.allclose(y, y_ref, atol=5e-3, rtol=5e-3), "mismatch vs JAX reference"

    print("KERNEL_OK")
</pallas_src>

<mosaic_0001>
module attributes {stable_mosaic.version = 11 : i64} {
  func.func @mlp_kernel(%arg0: i32, %arg1: memref<2x784xf32, #tpu.memory_space<vmem>>, %arg2: memref<784x256xf32, #tpu.memory_space<vmem>>, %arg3: memref<1x256xf32, #tpu.memory_space<vmem>>, %arg4: memref<256x64xf32, #tpu.memory_space<vmem>>, %arg5: memref<1x64xf32, #tpu.memory_space<vmem>>, %arg6: memref<64x128xf32, #tpu.memory_space<vmem>>, %arg7: memref<1x128xf32, #tpu.memory_space<vmem>>, %arg8: memref<2x128xf32, #tpu.memory_space<vmem>>) attributes {dimension_semantics = [#tpu.dimension_semantics<parallel>], iteration_bounds = array<i64: 1>, scalar_prefetch = 0 : i64, scratch_operands = 0 : i64, tpu.core_type = #tpu.core_type<tc>, window_params = [{transform_indices = @transform_0, window_bounds = array<i64: 2, 784>}, {pipeline_mode = #tpu.pipeline_mode<synchronous>, transform_indices = @transform_1, window_bounds = array<i64: 784, 256>}, {pipeline_mode = #tpu.pipeline_mode<synchronous>, transform_indices = @transform_2, window_bounds = array<i64: 1, 256>}, {pipeline_mode = #tpu.pipeline_mode<synchronous>, transform_indices = @transform_3, window_bounds = array<i64: 256, 64>}, {pipeline_mode = #tpu.pipeline_mode<synchronous>, transform_indices = @transform_4, window_bounds = array<i64: 1, 64>}, {pipeline_mode = #tpu.pipeline_mode<synchronous>, transform_indices = @transform_5, window_bounds = array<i64: 64, 128>}, {pipeline_mode = #tpu.pipeline_mode<synchronous>, transform_indices = @transform_6, window_bounds = array<i64: 1, 128>}, {transform_indices = @transform_7, window_bounds = array<i64: 2, 128>}]} {
    %c0 = arith.constant 0 : index
    %c0_0 = arith.constant 0 : index
    %0 = vector.load %arg1[%c0, %c0_0] : memref<2x784xf32, #tpu.memory_space<vmem>>, vector<2x784xf32>
    %1 = arith.truncf %0 : vector<2x784xf32> to vector<2x784xbf16>
    %c0_1 = arith.constant 0 : index
    %c0_2 = arith.constant 0 : index
    %2 = vector.load %arg2[%c0_1, %c0_2] : memref<784x256xf32, #tpu.memory_space<vmem>>, vector<784x256xf32>
    %3 = arith.truncf %2 : vector<784x256xf32> to vector<784x256xbf16>
    %cst = arith.constant dense<0.000000e+00> : vector<2x256xf32>
    %4 = tpu.matmul %1, %3, %cst {dimension_numbers = #tpu.dot_dimension_numbers<[1], [0], [0], [1], [0, 0, 1, 1], [], []>} : vector<2x784xbf16>, vector<784x256xbf16>, vector<2x256xf32> -> vector<2x256xf32>
    %c0_3 = arith.constant 0 : index
    %c0_4 = arith.constant 0 : index
    %5 = vector.load %arg3[%c0_3, %c0_4] : memref<1x256xf32, #tpu.memory_space<vmem>>, vector<1x256xf32>
    %6 = vector.broadcast %5 : vector<1x256xf32> to vector<2x256xf32>
    %7 = arith.addf %4, %6 : vector<2x256xf32>
    %cst_5 = arith.constant 0.000000e+00 : f32
    %8 = vector.broadcast %cst_5 : f32 to vector<2x256xf32>
    %9 = arith.maximumf %7, %8 : vector<2x256xf32>
    %10 = arith.truncf %9 : vector<2x256xf32> to vector<2x256xbf16>
    %c0_6 = arith.constant 0 : index
    %c0_7 = arith.constant 0 : index
    %11 = vector.load %arg4[%c0_6, %c0_7] : memref<256x64xf32, #tpu.memory_space<vmem>>, vector<256x64xf32>
    %12 = arith.truncf %11 : vector<256x64xf32> to vector<256x64xbf16>
    %cst_8 = arith.constant dense<0.000000e+00> : vector<2x64xf32>
    %13 = tpu.matmul %10, %12, %cst_8 {dimension_numbers = #tpu.dot_dimension_numbers<[1], [0], [0], [1], [0, 0, 1, 1], [], []>} : vector<2x256xbf16>, vector<256x64xbf16>, vector<2x64xf32> -> vector<2x64xf32>
    %c0_9 = arith.constant 0 : index
    %c0_10 = arith.constant 0 : index
    %14 = vector.load %arg5[%c0_9, %c0_10] : memref<1x64xf32, #tpu.memory_space<vmem>>, vector<1x64xf32>
    %15 = vector.broadcast %14 : vector<1x64xf32> to vector<2x64xf32>
    %16 = arith.addf %13, %15 : vector<2x64xf32>
    %cst_11 = arith.constant 0.000000e+00 : f32
    %17 = vector.broadcast %cst_11 : f32 to vector<2x64xf32>
    %18 = arith.maximumf %16, %17 : vector<2x64xf32>
    %19 = arith.truncf %18 : vector<2x64xf32> to vector<2x64xbf16>
    %c0_12 = arith.constant 0 : index
    %c0_13 = arith.constant 0 : index
    %20 = vector.load %arg6[%c0_12, %c0_13] : memref<64x128xf32, #tpu.memory_space<vmem>>, vector<64x128xf32>
    %21 = arith.truncf %20 : vector<64x128xf32> to vector<64x128xbf16>
    %cst_14 = arith.constant dense<0.000000e+00> : vector<2x128xf32>
    %22 = tpu.matmul %19, %21, %cst_14 {dimension_numbers = #tpu.dot_dimension_numbers<[1], [0], [0], [1], [0, 0, 1, 1], [], []>} : vector<2x64xbf16>, vector<64x128xbf16>, vector<2x128xf32> -> vector<2x128xf32>
    %c0_15 = arith.constant 0 : index
    %c0_16 = arith.constant 0 : index
    %23 = vector.load %arg7[%c0_15, %c0_16] : memref<1x128xf32, #tpu.memory_space<vmem>>, vector<1x128xf32>
    %24 = vector.broadcast %23 : vector<1x128xf32> to vector<2x128xf32>
    %25 = arith.addf %22, %24 : vector<2x128xf32>
    %c0_17 = arith.constant 0 : index
    %c0_18 = arith.constant 0 : index
    %26 = vector.load %arg8[%c0_17, %c0_18] : memref<2x128xf32, #tpu.memory_space<vmem>>, vector<2x128xf32>
    tpu.vector_store %arg8[%c0_17, %c0_18], %25 {strides = array<i32>} : memref<2x128xf32, #tpu.memory_space<vmem>>, vector<2x128xf32>,
    return
  }
  func.func @transform_0(%arg0: i32) -> (i32, i32) {
    %c0_i32 = arith.constant 0 : i32
    %c0_i32_0 = arith.constant 0 : i32
    return %arg0, %c0_i32 : i32, i32
  }
  func.func @transform_1(%arg0: i32) -> (i32, i32) {
    %c0_i32 = arith.constant 0 : i32
    %c0_i32_0 = arith.constant 0 : i32
    %c0_i32_1 = arith.constant 0 : i32
    return %c0_i32, %c0_i32_0 : i32, i32
  }
  func.func @transform_2(%arg0: i32) -> (i32, i32) {
    %c0_i32 = arith.constant 0 : i32
    %c0_i32_0 = arith.constant 0 : i32
    %c0_i32_1 = arith.constant 0 : i32
    return %c0_i32, %c0_i32_0 : i32, i32
  }
  func.func @transform_3(%arg0: i32) -> (i32, i32) {
    %c0_i32 = arith.constant 0 : i32
    %c0_i32_0 = arith.constant 0 : i32
    %c0_i32_1 = arith.constant 0 : i32
    return %c0_i32, %c0_i32_0 : i32, i32
  }
  func.func @transform_4(%arg0: i32) -> (i32, i32) {
    %c0_i32 = arith.constant 0 : i32
    %c0_i32_0 = arith.constant 0 : i32
    %c0_i32_1 = arith.constant 0 : i32
    return %c0_i32, %c0_i32_0 : i32, i32
  }
  func.func @transform_5(%arg0: i32) -> (i32, i32) {
    %c0_i32 = arith.constant 0 : i32
    %c0_i32_0 = arith.constant 0 : i32
    %c0_i32_1 = arith.constant 0 : i32
    return %c0_i32, %c0_i32_0 : i32, i32
  }
  func.func @transform_6(%arg0: i32) -> (i32, i32) {
    %c0_i32 = arith.constant 0 : i32
    %c0_i32_0 = arith.constant 0 : i32
    %c0_i32_1 = arith.constant 0 : i32
    return %c0_i32, %c0_i32_0 : i32, i32
  }
  func.func @transform_7(%arg0: i32) -> (i32, i32) {
    %c0_i32 = arith.constant 0 : i32
    %c0_i32_0 = arith.constant 0 : i32
    return %arg0, %c0_i32 : i32, i32
  }
}

</mosaic_0001>

<llo_original>
// kernel: tpu_custom_call.1
$region0: #{tpu_custom_call.1}
  #allocation0 [shape = 'u32[]', space=smem, size = 0x4, offset = 0x4, fixed_abs, tag = 'smem constant byte address 0x4 - core index']
  #allocation1 [shape = 'u32[144,128]{1,0:T(1,128)}', space=vmem, size = 0x12000, scoped, tag = 'internal scratch']
  %s0 = inlined_call_operand.vmem [shape: f32[2,784], index: 0, kind: input, shape index: {}]
  %s1 = inlined_call_operand.hbm [shape: f32[784,256], index: 1, kind: input, shape index: {}]
  %s2 = inlined_call_operand.vmem [shape: f32[1,256], index: 2, kind: input, shape index: {}]
  %s3 = inlined_call_operand.vmem [shape: f32[256,64], index: 3, kind: input, shape index: {}]
  %s4 = inlined_call_operand.vmem [shape: f32[1,64], index: 4, kind: input, shape index: {}]
  %s5 = inlined_call_operand.vmem [shape: f32[64,128], index: 5, kind: input, shape index: {}]
  %s6 = inlined_call_operand.vmem [shape: f32[1,128], index: 6, kind: input, shape index: {}]
  %s7 = inlined_call_operand.hbm [shape: f32[2,128], index: 7, kind: output, shape index: {}]
  %s8 = sld [smem:[#allocation0]]
  $region42: #{tpu_custom_call.1} parent=0
    _
  %s10 = ssub.s32 1, %s8
  %s11 = scalar_select 0, %s10, %s8
  $region1: #{tpu_custom_call.1} parent=0
    #allocation2 [shape = 'u8[802816]{0}', space=vmem, size = 0xc4000, scoped, tag = 'input window, operand 1, single buffered']
    #allocation3 [shape = 's32[1]{0}', space=sflag, size = 0x4, scoped, tag = 'scoped memory for tpu_custom_call.1']
    #allocation4 [shape = 's32[1]{0}', space=sflag, size = 0x4, scoped, tag = 'scoped memory for tpu_custom_call.1']
    #allocation5 [shape = 'u8[1024]{0}', space=vmem, size = 0x400, scoped, tag = 'output window, operand 0, single buffered']
    %12 = vsyncpa [#allocation3], 0
    %13 = vsyncpa [#allocation4], 0
    // Predicated region
    $region2: #{tpu_custom_call.1} parent=1 // pred_check
      _
    $region3: #{tpu_custom_call.1} parent=1 // pred_check_branch
      %15 = sbr.rel (0) target = $region5
    $region4: #{tpu_custom_call.1} parent=1 // pred_region
      _
    $region5: #{tpu_custom_call.1} parent=1 // pred_fallthru
      _
    // Predicated region
    $region6: #{tpu_custom_call.1} parent=1 // pred_check
      _
    $region7: #{tpu_custom_call.1} parent=1 // pred_check_branch
      %17 = sbr.rel (0) target = $region9
    $region8: #{tpu_custom_call.1} parent=1 // pred_region
      %s19 = ssub.s32 25088, 25088
      %20 = vsyncadd [#allocation3], %s19
      %s21 = sshll.u32 [#allocation2], 4
      %s22 = int_to_ptr.vmem [resolvable:$true] %s21
      %27 = dma.hbm_to_vmem [thread:$0]  %s1, 25088, %s22, [#allocation3], 256, 256, 16
    $region9: #{tpu_custom_call.1} parent=1 // pred_fallthru
      _
    // Predicated region
    $region10: #{tpu_custom_call.1} parent=1 // pred_check
      _
    $region11: #{tpu_custom_call.1} parent=1 // pred_check_branch
      %29 = sbr.rel (0) target = $region13
    $region12: #{tpu_custom_call.1} parent=1 // pred_region
      _
    $region13: #{tpu_custom_call.1} parent=1 // pred_fallthru
      _
    // Predicated region
    $region14: #{tpu_custom_call.1} parent=1 // pred_check
      _
    $region15: #{tpu_custom_call.1} parent=1 // pred_check_branch
      %31 = sbr.rel (0) target = $region17
    $region16: #{tpu_custom_call.1} parent=1 // pred_region
      _
    $region17: #{tpu_custom_call.1} parent=1 // pred_fallthru
      _
    // Predicated region
    $region18: #{tpu_custom_call.1} parent=1 // pred_check
      _
    $region19: #{tpu_custom_call.1} parent=1 // pred_check_branch
      %33 = sbr.rel (0) target = $region21
    $region20: #{tpu_custom_call.1} parent=1 // pred_region
      _
    $region21: #{tpu_custom_call.1} parent=1 // pred_fallthru
      _
    // Predicated region
    $region22: #{tpu_custom_call.1} parent=1 // pred_check
      _
    $region23: #{tpu_custom_call.1} parent=1 // pred_check_branch
      %35 = sbr.rel (0) target = $region25
    $region24: #{tpu_custom_call.1} parent=1 // pred_region
      _
    $region25: #{tpu_custom_call.1} parent=1 // pred_fallthru
      _
    // Predicated region
    $region26: #{tpu_custom_call.1} parent=1 // pred_check
      _
    $region27: #{tpu_custom_call.1} parent=1 // pred_check_branch
      %37 = sbr.rel (0) target = $region29
    $region28: #{tpu_custom_call.1} parent=1 // pred_region
      _
    $region29: #{tpu_custom_call.1} parent=1 // pred_fallthru
      _
    // Predicated region
    $region30: #{tpu_custom_call.1} parent=1 // pred_check
      _
    $region31: #{tpu_custom_call.1} parent=1 // pred_check_branch
      %39 = sbr.rel (0) target = $region33
    $region32: #{tpu_custom_call.1} parent=1 // pred_region
      %40 = dma.done [#allocation3], 25088
    $region33: #{tpu_custom_call.1} parent=1 // pred_fallthru
      _
    %v42 = vld [vmem:[%s0] sm:$0xff]
    %v43 = vld [vmem:[%s0 + $0x8] sm:$0x3f]
    %v46 = vcombine.high %v42, %v42
    %v48 = vunpack.c.l.s4 1983009808
    %v49 = vunpack.c.0.s8 %v48
    %v50 = vlaneseq
    %v51 = vshrl.u32 %v50, 7
    %v52 = vsub.s32 %v49, %v51
    %v53 = vrot.slane %v42, %v52
    %v55 = vunpack.c.l.s4 1983009808
    %v56 = vunpack.c.0.s8 %v55
    %v57 = vlaneseq
    %v58 = vshrl.u32 %v57, 7
    %v59 = vsub.s32 %v56, %v58
    %v60 = vrot.slane %v46, %v59
    %v61 = vcombine.high %v53, %v53
    %v62 = vcombine.high %v60, %v60
    %v63 = vcombine.high %v43, %v43
    %v65 = vunpack.c.l.s4 1983009808
    %v66 = vunpack.c.0.s8 %v65
    %v67 = vlaneseq
    %v68 = vshrl.u32 %v67, 7
    %v69 = vsub.s32 %v66, %v68
    %v70 = vrot.slane %v43, %v69
    %v72 = vunpack.c.l.s4 1983009808
    %v73 = vunpack.c.0.s8 %v72
    %v74 = vlaneseq
    %v75 = vshrl.u32 %v74, 7
    %v76 = vsub.s32 %v73, %v75
    %v77 = vrot.slane %v63, %v76
    %v78 = vcombine.high %v70, %v70
    %v86 = vpack.c.bf16 %v53, %v53
    %v87 = vpack.c.bf16 %v61, %v61
    %v88 = vpack.c.bf16 %v60, %v60
    %v89 = vpack.c.bf16 %v62, %v62
    %v90 = vpack.c.bf16 %v70, %v70
    %v91 = vpack.c.bf16 %v78, %v78
    %v92 = vpack.c.bf16 %v77, %v77
    %v93 = vld [vmem:[#allocation2] sm:$0xff]
    %v94 = vld [vmem:[#allocation2 + $0x8] sm:$0xff]
    %v95 = vld [vmem:[#allocation2 + $0x10] sm:$0xff]
    %v96 = vld [vmem:[#allocation2 + $0x18] sm:$0xff]
    %v97 = vld [vmem:[#allocation2 + $0x20] sm:$0xff]
    %v98 = vld [vmem:[#allocation2 + $0x28] sm:$0xff]
    %v99 = vld [vmem:[#allocation2 + $0x30] sm:$0xff]
    %v100 = vld [vmem:[#allocation2 + $0x38] sm:$0xff]
    %v101 = vld [vmem:[#allocation2 + $0x40] sm:$0xff]
    %v102 = vld [vmem:[#allocation2 + $0x48] sm:$0xff]
    %v103 = vld [vmem:[#allocation2 + $0x50] sm:$0xff]
    %v104 = vld [vmem:[#allocation2 + $0x58] sm:$0xff]
    %v105 = vld [vmem:[#allocation2 + $0x60] sm:$0xff]
    %v106 = vld [vmem:[#allocation2 + $0x68] sm:$0xff]
    %v107 = vld [vmem:[#allocation2 + $0x70] sm:$0xff]
    %v108 = vld [vmem:[#allocation2 + $0x78] sm:$0xff]
    %v109 = vld [vmem:[#allocation2 + $0x80] sm:$0xff]
    %v110 = vld [vmem:[#allocation2 + $0x88] sm:$0xff]
    %v111 = vld [vmem:[#allocation2 + $0x90] sm:$0xff]
    %v112 = vld [vmem:[#allocation2 + $0x98] sm:$0xff]
    %v113 = vld [vmem:[#allocation2 + $0xa0] sm:$0xff]
    %v114 = vld [vmem:[#allocation2 + $0xa8] sm:$0xff]
    %v115 = vld [vmem:[#allocation2 + $0xb0] sm:$0xff]
    %v116 = vld [vmem:[#allocation2 + $0xb8] sm:$0xff]
    %v117 = vld [vmem:[#allocation2 + $0xc0] sm:$0xff]
    %v118 = vld [vmem:[#allocation2 + $0xc8] sm:$0xff]
    %v119 = vld [vmem:[#allocation2 + $0xd0] sm:$0xff]
    %v120 = vld [vmem:[#allocation2 + $0xd8] sm:$0xff]
    %v121 = vld [vmem:[#allocation2 + $0xe0] sm:$0xff]
    %v122 = vld [vmem:[#allocation2 + $0xe8] sm:$0xff]
    %v123 = vld [vmem:[#allocation2 + $0xf0] sm:$0xff]
    %v124 = vld [vmem:[#allocation2 + $0xf8] sm:$0xff]
    %v125 = vld [vmem:[#allocation2 + $0x100] sm:$0xff]
    %v126 = vld [vmem:[#allocation2 + $0x108] sm:$0xff]
    %v127 = vld [vmem:[#allocation2 + $0x110] sm:$0xff]
    %v128 = vld [vmem:[#allocation2 + $0x118] sm:$0xff]
    %v129 = vld [vmem:[#allocation2 + $0x120] sm:$0xff]
    %v130 = vld [vmem:[#allocation2 + $0x128] sm:$0xff]
    %v131 = vld [vmem:[#allocation2 + $0x130] sm:$0xff]
    %v132 = vld [vmem:[#allocation2 + $0x138] sm:$0xff]
    %v133 = vld [vmem:[#allocation2 + $0x140] sm:$0xff]
    %v134 = vld [vmem:[#allocation2 + $0x148] sm:$0xff]
    %v135 = vld [vmem:[#allocation2 + $0x150] sm:$0xff]
    %v136 = vld [vmem:[#allocation2 + $0x158] sm:$0xff]
    %v137 = vld [vmem:[#allocation2 + $0x160] sm:$0xff]
    %v138 = vld [vmem:[#allocation2 + $0x168] sm:$0xff]
    %v139 = vld [vmem:[#allocation2 + $0x170] sm:$0xff]
    %v140 = vld [vmem:[#allocation2 + $0x178] sm:$0xff]
    %v141 = vld [vmem:[#allocation2 + $0x180] sm:$0xff]
    %v142 = vld [vmem:[#allocation2 + $0x188] sm:$0xff]
    %v143 = vld [vmem:[#allocation2 + $0x190] sm:$0xff]
    %v144 = vld [vmem:[#allocation2 + $0x198] sm:$0xff]
    %v145 = vld [vmem:[#allocation2 + $0x1a0] sm:$0xff]
    %v146 = vld [vmem:[#allocation2 + $0x1a8] sm:$0xff]
    %v147 = vld [vmem:[#allocation2 + $0x1b0] sm:$0xff]
    %v148 = vld [vmem:[#allocation2 + $0x1b8] sm:$0xff]
    %v149 = vld [vmem:[#allocation2 + $0x1c0] sm:$0xff]
    %v150 = vld [vmem:[#allocation2 + $0x1c8] sm:$0xff]
    %v151 = vld [vmem:[#allocation2 + $0x1d0] sm:$0xff]
    %v152 = vld [vmem:[#allocation2 + $0x1d8] sm:$0xff]
    %v153 = vld [vmem:[#allocation2 + $0x1e0] sm:$0xff]
    %v154 = vld [vmem:[#allocation2 + $0x1e8] sm:$0xff]
    %v155 = vld [vmem:[#allocation2 + $0x1f0] sm:$0xff]
    %v156 = vld [vmem:[#allocation2 + $0x1f8] sm:$0xff]
    %v157 = vld [vmem:[#allocation2 + $0x200] sm:$0xff]
    %v158 = vld [vmem:[#allocation2 + $0x208] sm:$0xff]
    %v159 = vld [vmem:[#allocation2 + $0x210] sm:$0xff]
    %v160 = vld [vmem:[#allocation2 + $0x218] sm:$0xff]
    %v161 = vld [vmem:[#allocation2 + $0x220] sm:$0xff]
    %v162 = vld [vmem:[#allocation2 + $0x228] sm:$0xff]
    %v163 = vld [vmem:[#allocation2 + $0x230] sm:$0xff]
    %v164 = vld [vmem:[#allocation2 + $0x238] sm:$0xff]
    %v165 = vld [vmem:[#allocation2 + $0x240] sm:$0xff]
    %v166 = vld [vmem:[#allocation2 + $0x248] sm:$0xff]
    %v167 = vld [vmem:[#allocation2 + $0x250] sm:$0xff]
    %v168 = vld [vmem:[#allocation2 + $0x258] sm:$0xff]
    %v169 = vld [vmem:[#allocation2 + $0x260] sm:$0xff]
    %v170 = vld [vmem:[#allocation2 + $0x268] sm:$0xff]
    %v171 = vld [vmem:[#allocation2 + $0x270] sm:$0xff]
    %v172 = vld [vmem:[#allocation2 + $0x278] sm:$0xff]
    %v173 = vld [vmem:[#allocation2 + $0x280] sm:$0xff]
    %v174 = vld [vmem:[#allocation2 + $0x288] sm:$0xff]
    %v175 = vld [vmem:[#allocation2 + $0x290] sm:$0xff]
    %v176 = vld [vmem:[#allocation2 + $0x298] sm:$0xff]
    %v177 = vld [vmem:[#allocation2 + $0x2a0] sm:$0xff]
    %v178 = vld [vmem:[#allocation2 + $0x2a8] sm:$0xff]
    %v179 = vld [vmem:[#allocation2 + $0x2b0] sm:$0xff]
    %v180 = vld [vmem:[#allocation2 + $0x2b8] sm:$0xff]
    %v181 = vld [vmem:[#allocation2 + $0x2c0] sm:$0xff]
    %v182 = vld [vmem:[#allocation2 + $0x2c8] sm:$0xff]
    %v183 = vld [vmem:[#allocation2 + $0x2d0] sm:$0xff]
    %v184 = vld [vmem:[#allocation2 + $0x2d8] sm:$0xff]
    %v185 = vld [vmem:[#allocation2 + $0x2e0] sm:$0xff]
    %v186 = vld [vmem:[#allocation2 + $0x2e8] sm:$0xff]
    %v187 = vld [vmem:[#allocation2 + $0x2f0] sm:$0xff]
    %v188 = vld [vmem:[#allocation2 + $0x2f8] sm:$0xff]
    %v189 = vld [vmem:[#allocation2 + $0x300] sm:$0xff]
    %v190 = vld [vmem:[#allocation2 + $0x308] sm:$0xff]
    %v191 = vld [vmem:[#allocation2 + $0x310] sm:$0xff]
    %v192 = vld [vmem:[#allocation2 + $0x318] sm:$0xff]
    %v193 = vld [vmem:[#allocation2 + $0x320] sm:$0xff]
    %v194 = vld [vmem:[#allocation2 + $0x328] sm:$0xff]
    %v195 = vld [vmem:[#allocation2 + $0x330] sm:$0xff]
    %v196 = vld [vmem:[#allocation2 + $0x338] sm:$0xff]
    %v197 = vld [vmem:[#allocation2 + $0x340] sm:$0xff]
    %v198 = vld [vmem:[#allocation2 + $0x348] sm:$0xff]
    %v199 = vld [vmem:[#allocation2 + $0x350] sm:$0xff]
    %v200 = vld [vmem:[#allocation2 + $0x358] sm:$0xff]
    %v201 = vld [vmem:[#allocation2 + $0x360] sm:$0xff]
    %v202 = vld [vmem:[#allocation2 + $0x368] sm:$0xff]
    %v203 = vld [vmem:[#allocation2 + $0x370] sm:$0xff]
    %v204 = vld [vmem:[#allocation2 + $0x378] sm:$0xff]
    %v205 = vld [vmem:[#allocation2 + $0x380] sm:$0xff]
    %v206 = vld [vmem:[#allocation2 + $0x388] sm:$0xff]
    %v207 = vld [vmem:[#allocation2 + $0x390] sm:$0xff]
    %v208 = vld [vmem:[#allocation2 + $0x398] sm:$0xff]
    %v209 = vld [vmem:[#allocation2 + $0x3a0] sm:$0xff]
    %v210 = vld [vmem:[#allocation2 + $0x3a8] sm:$0xff]
    %v211 = vld [vmem:[#allocation2 + $0x3b0] sm:$0xff]
    %v212 = vld [vmem:[#allocation2 + $0x3b8] sm:$0xff]
    %v213 = vld [vmem:[#allocation2 + $0x3c0] sm:$0xff]
    %v214 = vld [vmem:[#allocation2 + $0x3c8] sm:$0xff]
    %v215 = vld [vmem:[#allocation2 + $0x3d0] sm:$0xff]
    %v216 = vld [vmem:[#allocation2 + $0x3d8] sm:$0xff]
    %v217 = vld [vmem:[#allocation2 + $0x3e0] sm:$0xff]
    %v218 = vld [vmem:[#allocation2 + $0x3e8] sm:$0xff]
    %v219 = vld [vmem:[#allocation2 + $0x3f0] sm:$0xff]
    %v220 = vld [vmem:[#allocation2 + $0x3f8] sm:$0xff]
    %v221 = vld [vmem:[#allocation2 + $0x400] sm:$0xff]
    %v222 = vld [vmem:[#allocation2 + $0x408] sm:$0xff]
    %v223 = vld [vmem:[#allocation2 + $0x410] sm:$0xff]
    %v224 = vld [vmem:[#allocation2 + $0x418] sm:$0xff]
    %v225 = vld [vmem:[#allocation2 + $0x420] sm:$0xff]
    %v226 = vld [vmem:[#allocation2 + $0x428] sm:$0xff]
    %v227 = vld [vmem:[#allocation2 + $0x430] sm:$0xff]
    %v228 = vld [vmem:[#allocation2 + $0x438] sm:$0xff]
    %v229 = vld [vmem:[#allocation2 + $0x440] sm:$0xff]
    %v230 = vld [vmem:[#allocation2 + $0x448] sm:$0xff]
    %v231 = vld [vmem:[#allocation2 + $0x450] sm:$0xff]
    %v232 = vld [vmem:[#allocation2 + $0x458] sm:$0xff]
    %v233 = vld [vmem:[#allocation2 + $0x460] sm:$0xff]
    %v234 = vld [vmem:[#allocation2 + $0x468] sm:$0xff]
    %v235 = vld [vmem:[#allocation2 + $0x470] sm:$0xff]
    %v236 = vld [vmem:[#allocation2 + $0x478] sm:$0xff]
    %v237 = vld [vmem:[#allocation2 + $0x480] sm:$0xff]
    %v238 = vld [vmem:[#allocation2 + $0x488] sm:$0xff]
    %v239 = vld [vmem:[#allocation2 + $0x490] sm:$0xff]
    %v240 = vld [vmem:[#allocation2 + $0x498] sm:$0xff]
    %v241 = vld [vmem:[#allocation2 + $0x4a0] sm:$0xff]
    %v242 = vld [vmem:[#allocation2 + $0x4a8] sm:$0xff]
    %v243 = vld [vmem:[#allocation2 + $0x4b0] sm:$0xff]
    %v244 = vld [vmem:[#allocation2 + $0x4b8] sm:$0xff]
    %v245 = vld [vmem:[#allocation2 + $0x4c0] sm:$0xff]
    %v246 = vld [vmem:[#allocation2 + $0x4c8] sm:$0xff]
    %v247 = vld [vmem:[#allocation2 + $0x4d0] sm:$0xff]
    %v248 = vld [vmem:[#allocation2 + $0x4d8] sm:$0xff]
    %v249 = vld [vmem:[#allocation2 + $0x4e0] sm:$0xff]
    %v250 = vld [vmem:[#allocation2 + $0x4e8] sm:$0xff]
    %v251 = vld [vmem:[#allocation2 + $0x4f0] sm:$0xff]
    %v252 = vld [vmem:[#allocation2 + $0x4f8] sm:$0xff]
    %v253 = vld [vmem:[#allocation2 + $0x500] sm:$0xff]
    %v254 = vld [vmem:[#allocation2 + $0x508] sm:$0xff]
    %v255 = vld [vmem:[#allocation2 + $0x510] sm:$0xff]
    %v256 = vld [vmem:[#allocation2 + $0x518] sm:$0xff]
    %v257 = vld [vmem:[#allocation2 + $0x520] sm:$0xff]
    %v258 = vld [vmem:[#allocation2 + $0x528] sm:$0xff]
    %v259 = vld [vmem:[#allocation2 + $0x530] sm:$0xff]
    %v260 = vld [vmem:[#allocation2 + $0x538] sm:$0xff]
    %v261 = vld [vmem:[#allocation2 + $0x540] sm:$0xff]
    %v262 = vld [vmem:[#allocation2 + $0x548] sm:$0xff]
    %v263 = vld [vmem:[#allocation2 + $0x550] sm:$0xff]
    %v264 = vld [vmem:[#allocation2 + $0x558] sm:$0xff]
    %v265 = vld [vmem:[#allocation2 + $0x560] sm:$0xff]
    %v266 = vld [vmem:[#allocation2 + $0x568] sm:$0xff]
    %v267 = vld [vmem:[#allocation2 + $0x570] sm:$0xff]
    %v268 = vld [vmem:[#allocation2 + $0x578] sm:$0xff]
    %v269 = vld [vmem:[#allocation2 + $0x580] sm:$0xff]
    %v270 = vld [vmem:[#allocation2 + $0x588] sm:$0xff]
    %v271 = vld [vmem:[#allocation2 + $0x590] sm:$0xff]
    %v272 = vld [vmem:[#allocation2 + $0x598] sm:$0xff]
    %v273 = vld [vmem:[#allocation2 + $0x5a0] sm:$0xff]
    %v274 = vld [vmem:[#allocation2 + $0x5a8] sm:$0xff]
    %v275 = vld [vmem:[#allocation2 + $0x5b0] sm:$0xff]
    %v276 = vld [vmem:[#allocation2 + $0x5b8] sm:$0xff]
    %v277 = vld [vmem:[#allocation2 + $0x5c0] sm:$0xff]
    %v278 = vld [vmem:[#allocation2 + $0x5c8] sm:$0xff]
    %v279 = vld [vmem:[#allocation2 + $0x5d0] sm:$0xff]
    %v280 = vld [vmem:[#allocation2 + $0x5d8] sm:$0xff]
    %v281 = vld [vmem:[#allocation2 + $0x5e0] sm:$0xff]
    %v282 = vld [vmem:[#allocation2 + $0x5e8] sm:$0xff]
    %v283 = vld [vmem:[#allocation2 + $0x5f0] sm:$0xff]
    %v284 = vld [vmem:[#allocation2 + $0x5f8] sm:$0xff]
    %v285 = vld [vmem:[#allocation2 + $0x600] sm:$0xff]
    %v286 = vld [vmem:[#allocation2 + $0x608] sm:$0xff]
    %v287 = vld [vmem:[#allocation2 + $0x610] sm:$0xff]
    %v288 = vld [vmem:[#allocation2 + $0x618] sm:$0xff]
    %v289 = vpack.c.bf16 %v95, %v93
    %v290 = vpack.c.bf16 %v96, %v94
    %v291 = vpack.c.bf16 %v99, %v97
    %v292 = vpack.c.bf16 %v100, %v98
    %v293 = vpack.c.bf16 %v103, %v101
    %v294 = vpack.c.bf16 %v104, %v102
    %v295 = vpack.c.bf16 %v107, %v105
    %v296 = vpack.c.bf16 %v108, %v106
    %v297 = vpack.c.bf16 %v111, %v109
    %v298 = vpack.c.bf16 %v112, %v110
    %v299 = vpack.c.bf16 %v115, %v113
    %v300 = vpack.c.bf16 %v116, %v114
    %v301 = vpack.c.bf16 %v119, %v117
    %v302 = vpack.c.bf16 %v120, %v118
    %v303 = vpack.c.bf16 %v123, %v121
    %v304 = vpack.c.bf16 %v124, %v122
    %v305 = vpack.c.bf16 %v127, %v125
    %v306 = vpack.c.bf16 %v128, %v126
    %v307 = vpack.c.bf16 %v131, %v129
    %v308 = vpack.c.bf16 %v132, %v130
    %v309 = vpack.c.bf16 %v135, %v133
    %v310 = vpack.c.bf16 %v136, %v134
    %v311 = vpack.c.bf16 %v139, %v137
    %v312 = vpack.c.bf16 %v140, %v138
    %v313 = vpack.c.bf16 %v143, %v141
    %v314 = vpack.c.bf16 %v144, %v142
    %v315 = vpack.c.bf16 %v147, %v145
    %v316 = vpack.c.bf16 %v148, %v146
    %v317 = vpack.c.bf16 %v151, %v149
    %v318 = vpack.c.bf16 %v152, %v150
    %v319 = vpack.c.bf16 %v155, %v153
    %v320 = vpack.c.bf16 %v156, %v154
    %v321 = vpack.c.bf16 %v159, %v157
    %v322 = vpack.c.bf16 %v160, %v158
    %v323 = vpack.c.bf16 %v163, %v161
    %v324 = vpack.c.bf16 %v164, %v162
    %v325 = vpack.c.bf16 %v167, %v165
    %v326 = vpack.c.bf16 %v168, %v166
    %v327 = vpack.c.bf16 %v171, %v169
    %v328 = vpack.c.bf16 %v172, %v170
    %v329 = vpack.c.bf16 %v175, %v173
    %v330 = vpack.c.bf16 %v176, %v174
    %v331 = vpack.c.bf16 %v179, %v177
    %v332 = vpack.c.bf16 %v180, %v178
    %v333 = vpack.c.bf16 %v183, %v181
    %v334 = vpack.c.bf16 %v184, %v182
    %v335 = vpack.c.bf16 %v187, %v185
    %v336 = vpack.c.bf16 %v188, %v186
    %v337 = vpack.c.bf16 %v191, %v189
    %v338 = vpack.c.bf16 %v192, %v190
    %v339 = vpack.c.bf16 %v195, %v193
    %v340 = vpack.c.bf16 %v196, %v194
    %v341 = vpack.c.bf16 %v199, %v197
    %v342 = vpack.c.bf16 %v200, %v198
    %v343 = vpack.c.bf16 %v203, %v201
    %v344 = vpack.c.bf16 %v204, %v202
    %v345 = vpack.c.bf16 %v207, %v205
    %v346 = vpack.c.bf16 %v208, %v206
    %v347 = vpack.c.bf16 %v211, %v209
    %v348 = vpack.c.bf16 %v212, %v210
    %v349 = vpack.c.bf16 %v215, %v213
    %v350 = vpack.c.bf16 %v216, %v214
    %v351 = vpack.c.bf16 %v219, %v217
    %v352 = vpack.c.bf16 %v220, %v218
    %v353 = vpack.c.bf16 %v223, %v221
    %v354 = vpack.c.bf16 %v224, %v222
    %v355 = vpack.c.bf16 %v227, %v225
    %v356 = vpack.c.bf16 %v228, %v226
    %v357 = vpack.c.bf16 %v231, %v229
    %v358 = vpack.c.bf16 %v232, %v230
    %v359 = vpack.c.bf16 %v235, %v233
    %v360 = vpack.c.bf16 %v236, %v234
    %v361 = vpack.c.bf16 %v239, %v237
    %v362 = vpack.c.bf16 %v240, %v238
    %v363 = vpack.c.bf16 %v243, %v241
    %v364 = vpack.c.bf16 %v244, %v242
    %v365 = vpack.c.bf16 %v247, %v245
    %v366 = vpack.c.bf16 %v248, %v246
    %v367 = vpack.c.bf16 %v251, %v249
    %v368 = vpack.c.bf16 %v252, %v250
    %v369 = vpack.c.bf16 %v255, %v253
    %v370 = vpack.c.bf16 %v256, %v254
    %v371 = vpack.c.bf16 %v259, %v257
    %v372 = vpack.c.bf16 %v260, %v258
    %v373 = vpack.c.bf16 %v263, %v261
    %v374 = vpack.c.bf16 %v264, %v262
    %v375 = vpack.c.bf16 %v267, %v265
    %v376 = vpack.c.bf16 %v268, %v266
    %v377 = vpack.c.bf16 %v271, %v269
    %v378 = vpack.c.bf16 %v272, %v270
    %v379 = vpack.c.bf16 %v275, %v273
    %v380 = vpack.c.bf16 %v276, %v274
    %v381 = vpack.c.bf16 %v279, %v277
    %v382 = vpack.c.bf16 %v280, %v278
    %v383 = vpack.c.bf16 %v283, %v281
    %v384 = vpack.c.bf16 %v284, %v282
    %v385 = vpack.c.bf16 %v287, %v285
    %v386 = vpack.c.bf16 %v288, %v286
    %v387 = vld [vmem:[%s2] sm:$0x3]
    %v389 = vlaneseq
    %v390 = vshrl.u32 %v389, 7
    %v391 = vsub.s32 0, %v390
    %v392 = vrot.slane %v387, %v391
    %v393 = vlaneseq
    %v394 = vshrl.u32 %v393, 7
    %v395 = vsub.s32 1, %v394
    %v396 = vrot.slane %v387, %v395
    %vm399 = vcmask 130048
    %v401 = vsel %vm399, %v92, 0
    %403 = vmatprep.subr.bf16.mxu0 %v290
    %404 = vmatpush1.bf16.msra.mxu0 %v289
    %405 = vmatprep.subr.bf16.mxu0 %v292
    %406 = vmatpush1.bf16.msra.mxu0 %v291
    %407 = vmatprep.subr.bf16.mxu0 %v294
    %408 = vmatpush1.bf16.msra.mxu0 %v293
    %409 = vmatprep.subr.bf16.mxu0 %v296
    %410 = vmatpush1.bf16.msra.mxu0 %v295
    %411 = vmatprep.subr.bf16.mxu0 %v298
    %412 = vmatpush1.bf16.msra.mxu0 %v297
    %413 = vmatprep.subr.bf16.mxu0 %v300
    %414 = vmatpush1.bf16.msra.mxu0 %v299
    %415 = vmatprep.subr.bf16.mxu0 %v302
    %416 = vmatpush1.bf16.msra.mxu0 %v301
    %417 = vmatprep.subr.bf16.mxu0 %v304
    %418 = vmatpush1.bf16.msra.mxu0 %v303
    %419 = vmatprep.subr.bf16.mxu0 %v306
    %420 = vmatpush1.bf16.msra.mxu0 %v305
    %421 = vmatprep.subr.bf16.mxu0 %v308
    %422 = vmatpush1.bf16.msra.mxu0 %v307
    %423 = vmatprep.subr.bf16.mxu0 %v310
    %424 = vmatpush1.bf16.msra.mxu0 %v309
    %425 = vmatprep.subr.bf16.mxu0 %v312
    %426 = vmatpush1.bf16.msra.mxu0 %v311
    %427 = vmatprep.subr.bf16.mxu0 %v314
    %428 = vmatpush1.bf16.msra.mxu0 %v313
    %429 = vmatprep.subr.bf16.mxu0 %v316
    %430 = vmatpush1.bf16.msra.mxu0 %v315
    %431 = vmatprep.subr.bf16.mxu0 %v318
    %432 = vmatpush1.bf16.msra.mxu0 %v317
    %433 = vmatprep.subr.bf16.mxu0 %v320
    %434 = vmatpush1.bf16.msra.mxu0 %v319
    %435 = vmatprep.mubr.bf16.mxu0 %v87
    %436 = vmatmul.mubr.bf16.gmra.mrb[0].mxu0 %v86
    %v437 = vpop.f32.mrb[0].mxu0
    %v438 = vadd.f32 %v392, %v437
    %v439 = vpop.f32.mrb[0].mxu0
    %v440 = vadd.f32 %v396, %v439
    %v441 = vpop.f32.mrb[0].mxu0
    %v442 = vpop.f32.mrb[0].mxu0
    %443 = vdwg.mxu0
    %444 = vmatprep.subr.bf16.mxu0 %v322
    %445 = vmatpush1.bf16.msra.mxu0 %v321
    %446 = vmatprep.subr.bf16.mxu0 %v324
    %447 = vmatpush1.bf16.msra.mxu0 %v323
    %448 = vmatprep.subr.bf16.mxu0 %v326
    %449 = vmatpush1.bf16.msra.mxu0 %v325
    %450 = vmatprep.subr.bf16.mxu0 %v328
    %451 = vmatpush1.bf16.msra.mxu0 %v327
    %452 = vmatprep.subr.bf16.mxu0 %v330
    %453 = vmatpush1.bf16.msra.mxu0 %v329
    %454 = vmatprep.subr.bf16.mxu0 %v332
    %455 = vmatpush1.bf16.msra.mxu0 %v331
    %456 = vmatprep.subr.bf16.mxu0 %v334
    %457 = vmatpush1.bf16.msra.mxu0 %v333
    %458 = vmatprep.subr.bf16.mxu0 %v336
    %459 = vmatpush1.bf16.msra.mxu0 %v335
    %460 = vmatprep.subr.bf16.mxu0 %v338
    %461 = vmatpush1.bf16.msra.mxu0 %v337
    %462 = vmatprep.subr.bf16.mxu0 %v340
    %463 = vmatpush1.bf16.msra.mxu0 %v339
    %464 = vmatprep.subr.bf16.mxu0 %v342
    %465 = vmatpush1.bf16.msra.mxu0 %v341
    %466 = vmatprep.subr.bf16.mxu0 %v344
    %467 = vmatpush1.bf16.msra.mxu0 %v343
    %468 = vmatprep.subr.bf16.mxu0 %v346
    %469 = vmatpush1.bf16.msra.mxu0 %v345
    %470 = vmatprep.subr.bf16.mxu0 %v348
    %471 = vmatpush1.bf16.msra.mxu0 %v347
    %472 = vmatprep.subr.bf16.mxu0 %v350
    %473 = vmatpush1.bf16.msra.mxu0 %v349
    %474 = vmatprep.subr.bf16.mxu0 %v352
    %475 = vmatpush1.bf16.msra.mxu0 %v351
    %476 = vmatprep.mubr.bf16.mxu0 %v89
    %477 = vmatmul.mubr.bf16.gmra.mrb[0].mxu0 %v88
    %v478 = vpop.f32.mrb[0].mxu0
    %v479 = vadd.f32 %v438, %v478
    %v480 = vpop.f32.mrb[0].mxu0
    %v481 = vadd.f32 %v440, %v480
    %v482 = vpop.f32.mrb[0].mxu0
    %v483 = vpop.f32.mrb[0].mxu0
    %484 = vdwg.mxu0
    %485 = vmatprep.subr.bf16.mxu0 %v354
    %486 = vmatpush1.bf16.msra.mxu0 %v353
    %487 = vmatprep.subr.bf16.mxu0 %v356
    %488 = vmatpush1.bf16.msra.mxu0 %v355
    %489 = vmatprep.subr.bf16.mxu0 %v358
    %490 = vmatpush1.bf16.msra.mxu0 %v357
    %491 = vmatprep.subr.bf16.mxu0 %v360
    %492 = vmatpush1.bf16.msra.mxu0 %v359
    %493 = vmatprep.subr.bf16.mxu0 %v362
    %494 = vmatpush1.bf16.msra.mxu0 %v361
    %495 = vmatprep.subr.bf16.mxu0 %v364
    %496 = vmatpush1.bf16.msra.mxu0 %v363
    %497 = vmatprep.subr.bf16.mxu0 %v366
    %498 = vmatpush1.bf16.msra.mxu0 %v365
    %499 = vmatprep.subr.bf16.mxu0 %v368
    %500 = vmatpush1.bf16.msra.mxu0 %v367
    %501 = vmatprep.subr.bf16.mxu0 %v370
    %502 = vmatpush1.bf16.msra.mxu0 %v369
    %503 = vmatprep.subr.bf16.mxu0 %v372
    %504 = vmatpush1.bf16.msra.mxu0 %v371
    %505 = vmatprep.subr.bf16.mxu0 %v374
    %506 = vmatpush1.bf16.msra.mxu0 %v373
    %507 = vmatprep.subr.bf16.mxu0 %v376
    %508 = vmatpush1.bf16.msra.mxu0 %v375
    %509 = vmatprep.subr.bf16.mxu0 %v378
    %510 = vmatpush1.bf16.msra.mxu0 %v377
    %511 = vmatprep.subr.bf16.mxu0 %v380
    %512 = vmatpush1.bf16.msra.mxu0 %v379
    %513 = vmatprep.subr.bf16.mxu0 %v382
    %514 = vmatpush1.bf16.msra.mxu0 %v381
    %515 = vmatprep.subr.bf16.mxu0 %v384
    %516 = vmatpush1.bf16.msra.mxu0 %v383
    %517 = vmatprep.mubr.bf16.mxu0 %v91
    %518 = vmatmul.mubr.bf16.gmra.mrb[0].mxu0 %v90
    %v519 = vpop.f32.mrb[0].mxu0
    %v520 = vadd.f32 %v479, %v519
    %v521 = vpop.f32.mrb[0].mxu0
    %v522 = vadd.f32 %v481, %v521
    %v523 = vpop.f32.mrb[0].mxu0
    %v524 = vpop.f32.mrb[0].mxu0
    %525 = vdwg.mxu0
    %526 = vmatprep.subr.bf16.mxu0 %v386
    %527 = vmatpush1.bf16.msra.mxu0 %v385
    %528 = vmatprep.subr.bf16.mxu0 0
    %529 = vmatpush1.bf16.msra.mxu0 0
    %530 = vmatprep.subr.bf16.mxu0 0
    %531 = vmatpush1.bf16.msra.mxu0 0
    %532 = vmatprep.subr.bf16.mxu0 0
    %533 = vmatpush1.bf16.msra.mxu0 0
    %534 = vmatprep.subr.bf16.mxu0 0
    %535 = vmatpush1.bf16.msra.mxu0 0
    %536 = vmatprep.subr.bf16.mxu0 0
    %537 = vmatpush1.bf16.msra.mxu0 0
    %538 = vmatprep.subr.bf16.mxu0 0
    %539 = vmatpush1.bf16.msra.mxu0 0
    %540 = vmatprep.subr.bf16.mxu0 0
    %541 = vmatpush1.bf16.msra.mxu0 0
    %542 = vmatprep.subr.bf16.mxu0 0
    %543 = vmatpush1.bf16.msra.mxu0 0
    %544 = vmatprep.subr.bf16.mxu0 0
    %545 = vmatpush1.bf16.msra.mxu0 0
    %546 = vmatprep.subr.bf16.mxu0 0
    %547 = vmatpush1.bf16.msra.mxu0 0
    %548 = vmatprep.subr.bf16.mxu0 0
    %549 = vmatpush1.bf16.msra.mxu0 0
    %550 = vmatprep.subr.bf16.mxu0 0
    %551 = vmatpush1.bf16.msra.mxu0 0
    %552 = vmatprep.subr.bf16.mxu0 0
    %553 = vmatpush1.bf16.msra.mxu0 0
    %554 = vmatprep.subr.bf16.mxu0 0
    %555 = vmatpush1.bf16.msra.mxu0 0
    %556 = vmatprep.subr.bf16.mxu0 0
    %557 = vmatpush1.bf16.msra.mxu0 0
    %558 = vmatprep.mubr.bf16.mxu0 0
    %559 = vmatmul.mubr.bf16.gmra.mrb[0].mxu0 %v401
    %v560 = vpop.f32.mrb[0].mxu0
    %v561 = vadd.f32 %v520, %v560
    %v562 = vpop.f32.mrb[0].mxu0
    %v563 = vadd.f32 %v522, %v562
    %v564 = vpop.f32.mrb[0].mxu0
    %v565 = vpop.f32.mrb[0].mxu0
    %566 = vdwg.mxu0
    %v567 = vmax.f32 %v561, 0.0
    %v568 = vmax.f32 %v563, 0.0
    %v569 = vpack.c.bf16 %v567, %v567
    %v570 = vpack.c.bf16 %v568, %v568
    %v571 = vld [vmem:[%s3] sm:$0xff]
    %v572 = vld [vmem:[%s3 + $0x8] sm:$0xff]
    %v573 = vld [vmem:[%s3 + $0x10] sm:$0xff]
    %v574 = vld [vmem:[%s3 + $0x18] sm:$0xff]
    %v575 = vld [vmem:[%s3 + $0x20] sm:$0xff]
    %v576 = vld [vmem:[%s3 + $0x28] sm:$0xff]
    %v577 = vld [vmem:[%s3 + $0x30] sm:$0xff]
    %v578 = vld [vmem:[%s3 + $0x38] sm:$0xff]
    %v579 = vld [vmem:[%s3 + $0x40] sm:$0xff]
    %v580 = vld [vmem:[%s3 + $0x48] sm:$0xff]
    %v581 = vld [vmem:[%s3 + $0x50] sm:$0xff]
    %v582 = vld [vmem:[%s3 + $0x58] sm:$0xff]
    %v583 = vld [vmem:[%s3 + $0x60] sm:$0xff]
    %v584 = vld [vmem:[%s3 + $0x68] sm:$0xff]
    %v585 = vld [vmem:[%s3 + $0x70] sm:$0xff]
    %v586 = vld [vmem:[%s3 + $0x78] sm:$0xff]
    %v587 = vld [vmem:[%s3 + $0x80] sm:$0xff]
    %v588 = vld [vmem:[%s3 + $0x88] sm:$0xff]
    %v589 = vld [vmem:[%s3 + $0x90] sm:$0xff]
    %v590 = vld [vmem:[%s3 + $0x98] sm:$0xff]
    %v591 = vld [vmem:[%s3 + $0xa0] sm:$0xff]
    %v592 = vld [vmem:[%s3 + $0xa8] sm:$0xff]
    %v593 = vld [vmem:[%s3 + $0xb0] sm:$0xff]
    %v594 = vld [vmem:[%s3 + $0xb8] sm:$0xff]
    %v595 = vld [vmem:[%s3 + $0xc0] sm:$0xff]
    %v596 = vld [vmem:[%s3 + $0xc8] sm:$0xff]
    %v597 = vld [vmem:[%s3 + $0xd0] sm:$0xff]
    %v598 = vld [vmem:[%s3 + $0xd8] sm:$0xff]
    %v599 = vld [vmem:[%s3 + $0xe0] sm:$0xff]
    %v600 = vld [vmem:[%s3 + $0xe8] sm:$0xff]
    %v601 = vld [vmem:[%s3 + $0xf0] sm:$0xff]
    %v602 = vld [vmem:[%s3 + $0xf8] sm:$0xff]
    %v603 = vpack.c.bf16 %v572, %v571
    %v604 = vpack.c.bf16 %v574, %v573
    %v605 = vpack.c.bf16 %v576, %v575
    %v606 = vpack.c.bf16 %v578, %v577
    %v607 = vpack.c.bf16 %v580, %v579
    %v608 = vpack.c.bf16 %v582, %v581
    %v609 = vpack.c.bf16 %v584, %v583
    %v610 = vpack.c.bf16 %v586, %v585
    %v611 = vpack.c.bf16 %v588, %v587
    %v612 = vpack.c.bf16 %v590, %v589
    %v613 = vpack.c.bf16 %v592, %v591
    %v614 = vpack.c.bf16 %v594, %v593
    %v615 = vpack.c.bf16 %v596, %v595
    %v616 = vpack.c.bf16 %v598, %v597
    %v617 = vpack.c.bf16 %v600, %v599
    %v618 = vpack.c.bf16 %v602, %v601
    %v619 = vld [vmem:[%s4] sm:$0x1]
    %v621 = vlaneseq
    %v622 = vshrl.u32 %v621, 7
    %v623 = vsub.s32 0, %v622
    %v624 = vrot.slane %v619, %v623
    %626 = vmatprep.subr.bf16.mxu0 0
    %627 = vmatpush1.bf16.msra.mxu0 %v603
    %628 = vmatprep.subr.bf16.mxu0 0
    %629 = vmatpush1.bf16.msra.mxu0 %v604
    %630 = vmatprep.subr.bf16.mxu0 0
    %631 = vmatpush1.bf16.msra.mxu0 %v605
    %632 = vmatprep.subr.bf16.mxu0 0
    %633 = vmatpush1.bf16.msra.mxu0 %v606
    %634 = vmatprep.subr.bf16.mxu0 0
    %635 = vmatpush1.bf16.msra.mxu0 %v607
    %636 = vmatprep.subr.bf16.mxu0 0
    %637 = vmatpush1.bf16.msra.mxu0 %v608
    %638 = vmatprep.subr.bf16.mxu0 0
    %639 = vmatpush1.bf16.msra.mxu0 %v609
    %640 = vmatprep.subr.bf16.mxu0 0
    %641 = vmatpush1.bf16.msra.mxu0 %v610
    %642 = vmatprep.subr.bf16.mxu0 0
    %643 = vmatpush1.bf16.msra.mxu0 %v611
    %644 = vmatprep.subr.bf16.mxu0 0
    %645 = vmatpush1.bf16.msra.mxu0 %v612
    %646 = vmatprep.subr.bf16.mxu0 0
    %647 = vmatpush1.bf16.msra.mxu0 %v613
    %648 = vmatprep.subr.bf16.mxu0 0
    %649 = vmatpush1.bf16.msra.mxu0 %v614
    %650 = vmatprep.subr.bf16.mxu0 0
    %651 = vmatpush1.bf16.msra.mxu0 %v615
    %652 = vmatprep.subr.bf16.mxu0 0
    %653 = vmatpush1.bf16.msra.mxu0 %v616
    %654 = vmatprep.subr.bf16.mxu0 0
    %655 = vmatpush1.bf16.msra.mxu0 %v617
    %656 = vmatprep.subr.bf16.mxu0 0
    %657 = vmatpush1.bf16.msra.mxu0 %v618
    %658 = vmatprep.mubr.bf16.mxu0 %v570
    %659 = vmatmul.mubr.bf16.gmra.mrb[0].mxu0 %v569
    %v660 = vpop.f32.mrb[0].mxu0
    %v661 = vadd.f32 %v624, %v660
    %v662 = vpop.f32.mrb[0].mxu0
    %v663 = vpop.f32.mrb[0].mxu0
    %v664 = vpop.f32.mrb[0].mxu0
    %665 = vdwg.mxu0
    %v666 = vmax.f32 %v661, 0.0
    %v667 = vpack.c.bf16 %v666, %v666
    %v668 = vld [vmem:[%s5] sm:$0xff]
    %v669 = vld [vmem:[%s5 + $0x8] sm:$0xff]
    %v670 = vld [vmem:[%s5 + $0x10] sm:$0xff]
    %v671 = vld [vmem:[%s5 + $0x18] sm:$0xff]
    %v672 = vld [vmem:[%s5 + $0x20] sm:$0xff]
    %v673 = vld [vmem:[%s5 + $0x28] sm:$0xff]
    %v674 = vld [vmem:[%s5 + $0x30] sm:$0xff]
    %v675 = vld [vmem:[%s5 + $0x38] sm:$0xff]
    %v676 = vpack.c.bf16 %v669, %v668
    %v677 = vpack.c.bf16 %v671, %v670
    %v678 = vpack.c.bf16 %v673, %v672
    %v679 = vpack.c.bf16 %v675, %v674
    %v680 = vld [vmem:[%s6] sm:$0x1]
    %v682 = vlaneseq
    %v683 = vshrl.u32 %v682, 7
    %v684 = vsub.s32 0, %v683
    %v685 = vrot.slane %v680, %v684
    %vm687 = vcmask 523264
    %v689 = vsel %vm687, %v667, 0
    %691 = vmatprep.subr.bf16.mxu0 0
    %692 = vmatpush1.bf16.msra.mxu0 %v676
    %693 = vmatprep.subr.bf16.mxu0 0
    %694 = vmatpush1.bf16.msra.mxu0 %v677
    %695 = vmatprep.subr.bf16.mxu0 0
    %696 = vmatpush1.bf16.msra.mxu0 %v678
    %697 = vmatprep.subr.bf16.mxu0 0
    %698 = vmatpush1.bf16.msra.mxu0 %v679
    %699 = vmatprep.subr.bf16.mxu0 0
    %700 = vmatpush1.bf16.msra.mxu0 0
    %701 = vmatprep.subr.bf16.mxu0 0
    %702 = vmatpush1.bf16.msra.mxu0 0
    %703 = vmatprep.subr.bf16.mxu0 0
    %704 = vmatpush1.bf16.msra.mxu0 0
    %705 = vmatprep.subr.bf16.mxu0 0
    %706 = vmatpush1.bf16.msra.mxu0 0
    %707 = vmatprep.subr.bf16.mxu0 0
    %708 = vmatpush1.bf16.msra.mxu0 0
    %709 = vmatprep.subr.bf16.mxu0 0
    %710 = vmatpush1.bf16.msra.mxu0 0
    %711 = vmatprep.subr.bf16.mxu0 0
    %712 = vmatpush1.bf16.msra.mxu0 0
    %713 = vmatprep.subr.bf16.mxu0 0
    %714 = vmatpush1.bf16.msra.mxu0 0
    %715 = vmatprep.subr.bf16.mxu0 0
    %716 = vmatpush1.bf16.msra.mxu0 0
    %717 = vmatprep.subr.bf16.mxu0 0
    %718 = vmatpush1.bf16.msra.mxu0 0
    %719 = vmatprep.subr.bf16.mxu0 0
    %720 = vmatpush1.bf16.msra.mxu0 0
    %721 = vmatprep.subr.bf16.mxu0 0
    %722 = vmatpush1.bf16.msra.mxu0 0
    %723 = vmatprep.mubr.bf16.mxu0 0
    %724 = vmatmul.mubr.bf16.gmra.mrb[0].mxu0 %v689
    %v725 = vpop.f32.mrb[0].mxu0
    %v726 = vadd.f32 %v685, %v725
    %v727 = vpop.f32.mrb[0].mxu0
    %v728 = vpop.f32.mrb[0].mxu0
    %v729 = vpop.f32.mrb[0].mxu0
    %730 = vdwg.mxu0
    %731 = vst [vmem:[#allocation5] sm:$0x3] %v726
    // Predicated region
    $region34: #{tpu_custom_call.1} parent=1 // pred_check
      _
    $region35: #{tpu_custom_call.1} parent=1 // pred_check_branch
      %733 = sbr.rel (0) target = $region37
    $region36: #{tpu_custom_call.1} parent=1 // pred_region
      %s735 = ssub.s32 32, 32
      %736 = vsyncadd [#allocation4], %s735
      %s738 = sshll.u32 [#allocation5], 4
      %s739 = int_to_ptr.vmem [resolvable:$true] %s738
      %741 = dma.vmem_to_hbm [thread:$0]  %s739, 32, %s7, [#allocation4]
    $region37: #{tpu_custom_call.1} parent=1 // pred_fallthru
      _
    // Predicated region
    $region38: #{tpu_custom_call.1} parent=1 // pred_check
      _
    $region39: #{tpu_custom_call.1} parent=1 // pred_check_branch
      %743 = sbr.rel (0) target = $region41
    $region40: #{tpu_custom_call.1} parent=1 // pred_region
      %744 = dma.done [#allocation4], 32
    $region41: #{tpu_custom_call.1} parent=1 // pred_fallthru
      _
    %745 = vsyncpa [#allocation3], 1
    %746 = vsyncpa [#allocation4], 1

</llo_original>
